<compile_context>
chip_gen: v5e
topology: v5e:2x2
jax: 0.10.0
libtpu: 0.0.40
codegen_flags: <defaults>
</compile_context>

<pallas_src>
import math

import jax
import jax.numpy as jnp
from jax import lax
from jax.experimental import pallas as pl
from jax.experimental.pallas import tpu as pltpu


def _pos_embed_kernel(slab_ref, out_ref):
    # slab_ref: (L, TN) mini-slab, slab[l, j] == pe_weight[l, j % D]
    # out_ref : (TB, L, TN) output block
    vals = slab_ref[...]                      # hoisted once; L*TN/1024 live vregs
    tb = out_ref.shape[0]
    if tb <= 16:
        # Fully unrolled static stores (LLO scheduler sees everything).
        for i in range(tb):
            out_ref[i] = vals
    else:
        # Bounded vreg live range for large TB.
        def body(i, carry):
            out_ref[i] = vals
            return carry
        lax.fori_loop(0, tb, body, 0)


def _chip_policy():
    """(target_block_bytes, min_grid_steps) per TPU generation."""
    kind = ""
    try:
        kind = jax.devices()[0].device_kind.lower()
    except Exception:  # pragma: no cover - conservative fallback off-TPU
        pass
    if "v5" in kind or "v6" in kind:
        # 128 MiB physical VMEM, single TensorCore: bigger blocks amortize step overhead.
        return 8 << 20, 4
    # v7x (64 MiB VMEM per TC, 2 TCs) or unknown: stay conservative, want >=2 steps/core.
    return 4 << 20, 4


def _choose_tiling(B, L, C2D, D, itemsize, target_block_bytes, min_steps):
    """Pick (TB, TN): batch rows per block and lane-axis tile width.

    Constraints: TB | B; TN | C2D; TN % D == 0 (so one mini-slab serves every lane block);
    TN % 128 == 0 or TN == C2D (unmasked stores / block-shape legality).
    """
    slab_budget = 2 << 20                      # keep the resident mini-slab small
    vmem_cap = 40 << 20                        # conservative cap (fits v7x's 64 MiB/TC)

    period = (D * 128) // math.gcd(D, 128)     # lcm(D, 128): minimal lane-dense tile
    if C2D % period != 0:
        period = C2D                           # fallback: full lane axis (always legal)

    tn_options = [t for t in range(period, C2D + 1, period) if C2D % t == 0]
    tb_options = [t for t in range(1, B + 1) if B % t == 0]

    def score(tb, tn):
        bb = tb * L * tn * itemsize            # output block bytes (double-buffered)
        sb = L * tn * itemsize                 # resident slab bytes
        n = (B // tb) * (C2D // tn)            # total grid steps
        return (
            (2 * bb + 2 * sb) <= vmem_cap,     # must fit VMEM with double buffers
            sb <= slab_budget,                 # bounded resident slab
            bb <= target_block_bytes,          # per-chip block cap
            n >= min_steps,                    # >=2 steps/core on v7x, overlap elsewhere
            n % 2 == 0,                        # balanced megacore sharding
            bb if bb <= target_block_bytes else -bb,   # biggest block within budget
            -sb,                               # then smallest slab
        )

    tb, tn = max(((b, t) for t in tn_options for b in tb_options),
                 key=lambda p: score(*p))
    return tb, tn


def positional_embedding(x, pe_weight):
    """Pallas implementation of PositionalEmbedding.forward.

    Args:
      x: array of shape (B, C, S, ...) -- only B = x.shape[0] and S = x.shape[2] are used.
      pe_weight: (max_len, d_model) embedding table.
    Returns:
      (B, max_len, S, d_model) array with out[b, l, s, :] == pe_weight[l, :].
    """
    B = x.shape[0]
    C2 = x.shape[2]
    L, D = pe_weight.shape
    C2D = C2 * D
    itemsize = jnp.dtype(pe_weight.dtype).itemsize

    target_block_bytes, min_steps = _chip_policy()
    TB, TN = _choose_tiling(B, L, C2D, D, itemsize, target_block_bytes, min_steps)

    # Mini-slab (L, TN): slab[l, j] = pe_weight[l, j % D].  Since TN % D == 0 and every
    # TN-wide window of the flat (C2, D) lane axis starts at a multiple of D, this one
    # VMEM-resident slab is the correct source for every lane block (constant index_map).
    slab = jnp.tile(pe_weight, (1, TN // D))                       # (L, TN)

    grid = (B // TB, C2D // TN)
    block_bytes = TB * L * TN * itemsize
    slab_bytes = L * TN * itemsize
    out_bytes = B * L * C2D * itemsize

    # Output blocks + slab are double-buffered by the pipeline; add generous headroom.
    vmem_limit = max(16 << 20,
                     min(2 * block_bytes + 2 * slab_bytes + (8 << 20), 48 << 20))

    cost = pl.CostEstimate(
        flops=0,
        transcendentals=0,
        bytes_accessed=out_bytes + slab_bytes,
    )

    out_flat = pl.pallas_call(
        _pos_embed_kernel,
        out_shape=jax.ShapeDtypeStruct((B, L, C2D), pe_weight.dtype),
        grid=grid,
        in_specs=[
            # Constant block index -> mini-slab stays resident in VMEM (fetched once).
            pl.BlockSpec((L, TN), lambda b, n: (0, 0)),
        ],
        out_specs=pl.BlockSpec((TB, L, TN), lambda b, n: (b, 0, n)),
        compiler_params=pltpu.CompilerParams(
            dimension_semantics=("parallel", "parallel"),
            vmem_limit_bytes=int(vmem_limit),
        ),
        cost_estimate=cost,
    )(slab)

    # Pure row-major view: (B, L, C2*D) -> (B, L, C2, D); no data movement.
    return out_flat.reshape(B, L, C2, D)


if __name__ == "__main__":
    key = jax.random.PRNGKey(0)
    k_pe, k_x = jax.random.split(key)

    # Module config (synthetic, deterministic init matching nn.Embedding's N(0, 1) default).
    max_len = 8
    d_model = 32
    pe_weight = jax.random.normal(k_pe, (max_len, d_model), dtype=jnp.float32)

    # Example input: NCHW-ish (B, C, S, W). Only B and S matter to the forward.
    x = jax.random.normal(k_x, (2, 4, 16, 16), dtype=jnp.float32)

    out = positional_embedding(x, pe_weight)
    out = jax.block_until_ready(out)

    # Reference (plain JAX) check of the broadcast semantics.
    B, C2 = x.shape[0], x.shape[2]
    ref = jnp.broadcast_to(pe_weight[None, :, None, :], (B, max_len, C2, d_model))

    assert out.shape == (B, max_len, C2, d_model), out.shape
    assert out.dtype == jnp.float32
    assert jnp.allclose(out, ref), "mismatch vs reference broadcast"

    print("KERNEL_OK")
</pallas_src>

<mosaic_0001>
module attributes {stable_mosaic.version = 11 : i64} {
  func.func @_pos_embed_kernel(%arg0: i32, %arg1: i32, %arg2: memref<8x128xf32, #tpu.memory_space<vmem>>, %arg3: memref<2x8x128xf32, #tpu.memory_space<vmem>>) attributes {dimension_semantics = [#tpu.dimension_semantics<parallel>, #tpu.dimension_semantics<parallel>], iteration_bounds = array<i64: 1, 4>, scalar_prefetch = 0 : i64, scratch_operands = 0 : i64, tpu.core_type = #tpu.core_type<tc>, window_params = [{pipeline_mode = #tpu.pipeline_mode<synchronous>, transform_indices = @transform_0, window_bounds = array<i64: 8, 128>}, {transform_indices = @transform_1, window_bounds = array<i64: 2, 8, 128>}]} {
    %c0 = arith.constant 0 : index
    %c0_0 = arith.constant 0 : index
    %0 = vector.load %arg2[%c0, %c0_0] : memref<8x128xf32, #tpu.memory_space<vmem>>, vector<8x128xf32>
    %c0_1 = arith.constant 0 : index
    %c0_2 = arith.constant 0 : index
    %c0_3 = arith.constant 0 : index
    %1 = vector.load %arg3[%c0_1, %c0_2, %c0_3] : memref<2x8x128xf32, #tpu.memory_space<vmem>>, vector<1x8x128xf32>
    %2 = vector.shape_cast %1 : vector<1x8x128xf32> to vector<8x128xf32>
    %3 = vector.shape_cast %0 : vector<8x128xf32> to vector<1x8x128xf32>
    tpu.vector_store %arg3[%c0_1, %c0_2, %c0_3], %3 {strides = array<i32>} : memref<2x8x128xf32, #tpu.memory_space<vmem>>, vector<1x8x128xf32>,
    %c1 = arith.constant 1 : index
    %c0_4 = arith.constant 0 : index
    %c0_5 = arith.constant 0 : index
    %4 = vector.load %arg3[%c1, %c0_4, %c0_5] : memref<2x8x128xf32, #tpu.memory_space<vmem>>, vector<1x8x128xf32>
    %5 = vector.shape_cast %4 : vector<1x8x128xf32> to vector<8x128xf32>
    %6 = vector.shape_cast %0 : vector<8x128xf32> to vector<1x8x128xf32>
    tpu.vector_store %arg3[%c1, %c0_4, %c0_5], %6 {strides = array<i32>} : memref<2x8x128xf32, #tpu.memory_space<vmem>>, vector<1x8x128xf32>,
    return
  }
  func.func @transform_0(%arg0: i32, %arg1: i32) -> (i32, i32) {
    %c0_i32 = arith.constant 0 : i32
    %c0_i32_0 = arith.constant 0 : i32
    %c0_i32_1 = arith.constant 0 : i32
    return %c0_i32, %c0_i32_0 : i32, i32
  }
  func.func @transform_1(%arg0: i32, %arg1: i32) -> (i32, i32, i32) {
    %c0_i32 = arith.constant 0 : i32
    %c0_i32_0 = arith.constant 0 : i32
    return %arg0, %c0_i32, %arg1 : i32, i32, i32
  }
}

</mosaic_0001>

<llo_original>
// kernel: tpu_custom_call.1
$region0: #{tpu_custom_call.1}
  #allocation0 [shape = 'u32[]', space=smem, size = 0x4, offset = 0x4, fixed_abs, tag = 'smem constant byte address 0x4 - core index']
  #allocation1 [shape = 'u32[72,128]{1,0:T(1,128)}', space=vmem, size = 0x9000, scoped, tag = 'internal scratch']
  %s0 = inlined_call_operand.hbm [shape: f32[8,128], index: 0, kind: input, shape index: {}]
  %s1 = inlined_call_operand.hbm [shape: f32[2,8,512], index: 1, kind: output, shape index: {}]
  %s2 = sld [smem:[#allocation0]]
  $region41: #{tpu_custom_call.1} parent=0
    _
  %s4 = ssub.s32 1, %s2
  %s5 = scalar_select 0, %s4, %s2
  $region1: #{tpu_custom_call.1} parent=0
    #allocation2 [shape = 'u8[4096]{0}', space=vmem, size = 0x1000, scoped, tag = 'input window, operand 0, single buffered']
    #allocation3 [shape = 's32[2]{0}', space=sflag, size = 0x8, scoped, tag = 'scoped memory for tpu_custom_call.1']
    #allocation4 [shape = 's32[2]{0}', space=sflag, size = 0x8, scoped, tag = 'scoped memory for tpu_custom_call.1']
    #allocation5 [shape = 'u8[16384]{0}', space=vmem, size = 0x4000, scoped, tag = 'output window, operand 0']
    %6 = vsyncpa [#allocation3], 0
    %7 = vsyncpa [#allocation4], 0
    %s8 = scalar_lea.sflag [#allocation4], 1
    %9 = vsyncpa %s8, 0
    loop: start=0, step=1, limit=6
    $region2: #{tpu_custom_call.1} parent=1 // loop_pre_header
      _
    $region3: #{tpu_custom_call.1} parent=1 // loop_header
      %s11 = sphi 0, %s15
      %p12 = scmp.ge.s32.totalorder %s11, 6
      %s18 = sphi 0, %s30
      %s19 = sphi 0, %s26
      %s20 = sphi 0, %s18
      %s21 = sphi 0, %s19
      %s22 = sphi 0, %s20
      %s23 = sphi 0, %s21
      %s31 = sphi 0, %s31
      %s33 = sphi 0, %s31
      %s34 = sphi 0, %s33
      %s48 = sphi 0, %s34
      %s56 = sphi 0, %s58
      %s59 = sphi 0, %s56
      %s60 = sphi 0, %s59
      %s76 = sphi 0, %s60
    $region4: #{tpu_custom_call.1} parent=1 // loop_header_branch
      %14 = sbr.rel (%p12) target = $region8
    $region5: #{tpu_custom_call.1} parent=1 // loop_body
      %s16 = ssub.s32 %s11, 1
      %s17 = ssub.s32 %s11, 2
      %s24 = sadd.s32 1, %s19
      %p25 = scmp.ge.s32.totalorder %s24, 4
      %s26 = scalar_select %p25, 0, %s24
      %s27 = sadd.s32 1, %s18
      %s28 = scalar_select %p25, %s27, %s18
      %p29 = scmp.ge.s32.totalorder %s28, 1
      %s30 = scalar_select %p29, 0, %s28
      %s32 = sadd.s32 %s31, 1
      %p35 = scmp.eq.s32.totalorder %s11, 3
      %p36 = scmp.ne.s32.totalorder %s31, %s33
      %p37 = scmp.eq.s32.totalorder %s11, 0
      %p38 = por %p36, %p37
      %p39 = scmp.ne.s32.totalorder %s31, %s33
      %p40 = scmp.eq.s32.totalorder %s16, 3
      %p41 = por %p39, %p40
      %p42 = scmp.ne.s32.totalorder %s33, %s34
      %p43 = scmp.eq.s32.totalorder %s16, 0
      %p44 = por %p42, %p43
      %p45 = scmp.ne.s32.totalorder %s33, %s34
      %p46 = scmp.eq.s32.totalorder %s17, 3
      %p47 = por %p45, %p46
      %p49 = scmp.ne.s32.totalorder %s34, %s48
      %p50 = scmp.eq.s32.totalorder %s17, 0
      %p51 = por %p49, %p50
      %s52 = ssub.s32 %s18, %s30
      %s53 = ssub.s32 %s19, %s26
      %s54 = sor.u32 %s52, %s53
      %p55 = scmp.eq.s32.totalorder %s54, 0
      %s57 = sadd.s32 %s56, 1
      %s58 = scalar_select %p55, %s56, %s57
      %p61 = pneg %p55
      %p62 = scmp.eq.s32.totalorder %s11, 3
      %p63 = por %p61, %p62
      %p64 = scmp.ne.s32.totalorder %s56, %s59
      %p65 = scmp.eq.s32.totalorder %s11, 0
      %p66 = por %p64, %p65
      %p67 = scmp.ne.s32.totalorder %s56, %s59
      %p68 = scmp.eq.s32.totalorder %s16, 3
      %p69 = por %p67, %p68
      %p70 = scmp.ne.s32.totalorder %s59, %s60
      %p71 = scmp.eq.s32.totalorder %s16, 0
      %p72 = por %p70, %p71
      %p73 = scmp.ne.s32.totalorder %s59, %s60
      %p74 = scmp.eq.s32.totalorder %s17, 3
      %p75 = por %p73, %p74
      %p77 = scmp.ne.s32.totalorder %s60, %s76
      %p78 = scmp.eq.s32.totalorder %s17, 0
      %p79 = por %p77, %p78
      %p80 = scmp.le.s32.totalorder 1, %s11
      %p81 = scmp.lt.s32.totalorder %s11, 5
      %p82 = pnand %p80, %p81
      %p83 = pneg %p82
      // Predicated region
      $region9: #{tpu_custom_call.1} parent=5 // pred_check
        _
      $region10: #{tpu_custom_call.1} parent=5 // pred_check_branch
        %85 = sbr.rel (%p82) target = $region12
      $region11: #{tpu_custom_call.1} parent=5 // pred_region
        %s86 = ssub.s32 %s11, 1
        // Predicated region
        $region13: #{tpu_custom_call.1} parent=11 // pred_check
          %p87 = pneg %p44
        $region14: #{tpu_custom_call.1} parent=11 // pred_check_branch
          %89 = sbr.rel (%p87) target = $region16
        $region15: #{tpu_custom_call.1} parent=11 // pred_region
          %91 = vsyncadd [#allocation3], 0
          %s93 = sshll.u32 %s0, 4
          %s94 = int_to_ptr.hbm [resolvable:$true] %s93
          %s95 = sshll.u32 [#allocation2], 4
          %s96 = int_to_ptr.vmem [resolvable:$true] %s95
          %98 = dma.hbm_to_vmem [thread:$0]  %s94, 128, %s96, [#allocation3]
        $region16: #{tpu_custom_call.1} parent=11 // pred_fallthru
          _
      $region12: #{tpu_custom_call.1} parent=5 // pred_fallthru
        _
      %p99 = scmp.lt.s32.totalorder %s11, 4
      // Predicated region
      $region17: #{tpu_custom_call.1} parent=5 // pred_check
        %p100 = pneg %p99
      $region18: #{tpu_custom_call.1} parent=5 // pred_check_branch
        %102 = sbr.rel (%p100) target = $region20
      $region19: #{tpu_custom_call.1} parent=5 // pred_region
        _
      $region20: #{tpu_custom_call.1} parent=5 // pred_fallthru
        _
      %p103 = scmp.le.s32.totalorder 1, %s11
      %p104 = scmp.lt.s32.totalorder %s11, 5
      %p105 = pnand %p103, %p104
      %p106 = pneg %p105
      // Predicated region
      $region21: #{tpu_custom_call.1} parent=5 // pred_check
        _
      $region22: #{tpu_custom_call.1} parent=5 // pred_check_branch
        %108 = sbr.rel (%p105) target = $region24
      $region23: #{tpu_custom_call.1} parent=5 // pred_region
        %s109 = ssub.s32 %s11, 1
        // Predicated region
        $region25: #{tpu_custom_call.1} parent=23 // pred_check
          %p110 = pneg %p44
        $region26: #{tpu_custom_call.1} parent=23 // pred_check_branch
          %112 = sbr.rel (%p110) target = $region28
        $region27: #{tpu_custom_call.1} parent=23 // pred_region
          %114 = dma.done [#allocation3], 128
        $region28: #{tpu_custom_call.1} parent=23 // pred_fallthru
          _
        %p115 = pneg %p44
        %p116 = pneg %p41
        %p117 = pneg %p72
        %p118 = pneg %p69
        %s119 = sand.u32 %s59, 1
        %s120 = scalar_lea.sflag [#allocation4], %s119
        %s121 = sand.u32 %s59, 1
        %s122 = smul.addr %s121, 16
        %s123 = scalar_lea.vmem [#allocation5], %s122
        %s124 = smul.u32 2, %s20
        %v125 = vld [vmem:[#allocation2] sm:$0xff]
        %126 = vst [vmem:[%s123] sm:$0xff] %v125
        %s127 = scalar_lea.vmem %s123, 8 [#allocation5]
        %128 = vst [vmem:[%s127] sm:$0xff] %v125
        %s129 = sand.u32 %s59, 1
        %s130 = scalar_lea.sflag [#allocation4], %s129
        %s131 = sand.u32 %s59, 1
        %s132 = smul.addr %s131, 16
        %s133 = scalar_lea.vmem [#allocation5], %s132
        // Predicated region
        $region29: #{tpu_custom_call.1} parent=23 // pred_check
          %p134 = pneg %p69
        $region30: #{tpu_custom_call.1} parent=23 // pred_check_branch
          %136 = sbr.rel (%p134) target = $region32
        $region31: #{tpu_custom_call.1} parent=23 // pred_region
          %s137 = smul.u32 2, %s20
          %139 = vsyncadd %s130, 0
          %s140 = smul.addr %s137, 4
          %s141 = sadd.s32 %s21, %s140
          %s142 = smul.addr %s141, 8
          %s143 = scalar_lea.hbm %s1, %s142
          %s144 = sshll.u32 %s133, 4
          %s145 = int_to_ptr.vmem [resolvable:$true] %s144
          %s146 = sshll.u32 %s143, 4
          %s147 = int_to_ptr.hbm [resolvable:$true] %s146
          %152 = dma.vmem_to_hbm [thread:$0]  %s145, 256, %s147, %s130, 128, 512, 8
        $region32: #{tpu_custom_call.1} parent=23 // pred_fallthru
          _
      $region24: #{tpu_custom_call.1} parent=5 // pred_fallthru
        _
      %p153 = scmp.le.s32.totalorder 2, %s11
      // Predicated region
      $region33: #{tpu_custom_call.1} parent=5 // pred_check
        %p154 = pneg %p153
      $region34: #{tpu_custom_call.1} parent=5 // pred_check_branch
        %156 = sbr.rel (%p154) target = $region36
      $region35: #{tpu_custom_call.1} parent=5 // pred_region
        %s157 = ssub.s32 %s11, 2
        // Predicated region
        $region37: #{tpu_custom_call.1} parent=35 // pred_check
          %p158 = pneg %p75
        $region38: #{tpu_custom_call.1} parent=35 // pred_check_branch
          %160 = sbr.rel (%p158) target = $region40
        $region39: #{tpu_custom_call.1} parent=35 // pred_region
          %s161 = sand.u32 %s60, 1
          %s162 = scalar_lea.sflag [#allocation4], %s161
          %s163 = sand.u32 %s60, 1
          %s164 = smul.addr %s163, 16
          %s165 = scalar_lea.vmem [#allocation5], %s164
          %167 = dma.done %s162, 256
        $region40: #{tpu_custom_call.1} parent=35 // pred_fallthru
          _
      $region36: #{tpu_custom_call.1} parent=5 // pred_fallthru
        _
    $region6: #{tpu_custom_call.1} parent=1 // loop_footer
      %s15 = sadd.s32 1, %s11
    $region7: #{tpu_custom_call.1} parent=1 // loop_footer_branch
      %10 = sbr.rel target = $region3
    $region8: #{tpu_custom_call.1} parent=1 // loop_exit
      _
    %168 = vsyncpa [#allocation3], 1
    %s169 = scalar_lea.sflag [#allocation3], 1
    %170 = vsyncpa %s169, 1
    %171 = vsyncpa [#allocation4], 1
    %s172 = scalar_lea.sflag [#allocation4], 1
    %173 = vsyncpa %s172, 1

</llo_original>
